<compile_context>
chip_gen: v7x
topology: tpu7x:2x2x1
jax: 0.10.0
libtpu: 0.0.40
codegen_flags: <defaults>
</compile_context>

<pallas_src>
import jax
import jax.numpy as jnp
from jax.experimental import pallas as pl
from jax.experimental.pallas import tpu as pltpu

OUT_PAD = 128  # lane-dense padded width for the final (out_dim=2) layer


def _mlp_kernel(x_ref, w1_ref, w2_ref, b2_ref, w3_ref, b3_ref, o_ref):
    # x tile: [TILE_B, H] f32 -> bf16 for the MXU, accumulate in f32.
    x = x_ref[...].astype(jnp.bfloat16)

    # linear1 (no bias) + ReLU
    h1 = jnp.dot(x, w1_ref[...], preferred_element_type=jnp.float32)
    h1 = jnp.maximum(h1, 0.0)

    # linear2 (bias) + ReLU
    h2 = jnp.dot(h1.astype(jnp.bfloat16), w2_ref[...],
                 preferred_element_type=jnp.float32)
    h2 = jnp.maximum(h2 + b2_ref[...], 0.0)

    # linear3 (bias, padded to OUT_PAD lanes) + Sigmoid, store bf16 lane-dense.
    logits = jnp.dot(h2.astype(jnp.bfloat16), w3_ref[...],
                     preferred_element_type=jnp.float32)
    o_ref[...] = jax.nn.sigmoid(logits + b3_ref[...]).astype(o_ref.dtype)


def prepare_params(w1, w2, b2, w3, b3):
    """One-time glue: transpose PyTorch [out,in] weights to [in,out], cast the
    matmul operands to bf16, keep biases f32 as [1, out] rows, and zero-pad
    the final layer out to OUT_PAD lanes for a lane-dense output store."""
    h = w1.shape[1]
    out_dim = w3.shape[0]
    w1_t = jnp.transpose(w1).astype(jnp.bfloat16)                      # [H, H]
    w2_t = jnp.transpose(w2).astype(jnp.bfloat16)                      # [H, H]
    w3_t = jnp.zeros((h, OUT_PAD), jnp.bfloat16)
    w3_t = w3_t.at[:, :out_dim].set(jnp.transpose(w3).astype(jnp.bfloat16))
    b2_r = b2.reshape(1, -1).astype(jnp.float32)                       # [1, H]
    b3_r = jnp.zeros((1, OUT_PAD), jnp.float32)
    b3_r = b3_r.at[0, :out_dim].set(b3.astype(jnp.float32))
    return (w1_t, w2_t, b2_r, w3_t, b3_r), out_dim


def _round_up(v, m):
    return ((v + m - 1) // m) * m


def naive_mlp(x, params, out_dim, *, tile_b=1024):
    """x: [B, H] float32. params: output of prepare_params (hot path does no
    transposes / reshapes / padding)."""
    w1_t, w2_t, b2_r, w3_t, b3_r = params
    b, h = x.shape

    # Batch tile: multiple of 8 sublanes, big by default (per-step overhead
    # dominates at small H), but never bigger than half the batch (rounded up
    # to 8) so that when b allows it the grid has >= 2 steps and both v7x
    # TensorCores are used.  No padding of x: Pallas handles the partial last
    # block; garbage rows there are row-independent and sliced off below.
    half_b = _round_up(max(1, -(-b // 2)), 8)
    tile_b = max(8, min(_round_up(tile_b, 8), half_b))

    grid = (pl.cdiv(b, tile_b),)

    # Weights / biases: index_map -> (0, 0) keeps them VMEM-resident across
    # the batch grid.  x / out are tiled over batch (double-buffered DMA).
    resident = lambda shape: pl.BlockSpec(shape, lambda i: (0, 0))

    cost = pl.CostEstimate(
        flops=int(2 * b * h * (2 * h + OUT_PAD)),
        transcendentals=int(b * OUT_PAD),
        bytes_accessed=int(b * h * 4 + b * OUT_PAD * 2
                           + 2 * h * h * 2 + h * OUT_PAD * 2
                           + h * 4 + OUT_PAD * 4),
    )

    out_padded = pl.pallas_call(
        _mlp_kernel,
        # bf16 output halves HBM writeback (the dominant traffic: 128 lanes
        # out vs only H=16 lanes in per row).
        out_shape=jax.ShapeDtypeStruct((b, OUT_PAD), jnp.bfloat16),
        grid=grid,
        in_specs=[
            pl.BlockSpec((tile_b, h), lambda i: (i, 0)),    # x
            resident((h, h)),                               # w1^T (bf16)
            resident((h, h)),                               # w2^T (bf16)
            resident((1, h)),                               # b2   (f32)
            resident((h, OUT_PAD)),                         # w3^T padded (bf16)
            resident((1, OUT_PAD)),                         # b3 padded   (f32)
        ],
        out_specs=pl.BlockSpec((tile_b, OUT_PAD), lambda i: (i, 0)),
        compiler_params=pltpu.CompilerParams(
            dimension_semantics=("parallel",),   # shard batch over v7x's 2 TCs
            vmem_limit_bytes=32 * 1024 * 1024,   # safe on v5e/v6e/v7x at H=16
        ),
        cost_estimate=cost,
    )(x, w1_t, w2_t, b2_r, w3_t, b3_r)

    # Strip the lane padding of the final layer and upcast back to f32.
    # (Padded lanes hold sigmoid(0)=0.5 — the slice is load-bearing.)
    return out_padded[:, :out_dim].astype(jnp.float32)


if __name__ == "__main__":
    hidden_size = 16
    batch = 8

    key = jax.random.PRNGKey(0)
    kx, k1, k2, kb2, k3, kb3 = jax.random.split(key, 6)

    # Deterministic inputs / parameters (PyTorch nn.Linear layout: [out, in]).
    x = jax.random.normal(kx, (batch, hidden_size), dtype=jnp.float32)
    w1 = jax.random.normal(k1, (hidden_size, hidden_size), dtype=jnp.float32) * 0.1
    w2 = jax.random.normal(k2, (hidden_size, hidden_size), dtype=jnp.float32) * 0.1
    b2 = jax.random.normal(kb2, (hidden_size,), dtype=jnp.float32) * 0.1
    w3 = jax.random.normal(k3, (2, hidden_size), dtype=jnp.float32) * 0.1
    b3 = jax.random.normal(kb3, (2,), dtype=jnp.float32) * 0.1

    # One-time parameter preparation (outside the hot path).
    params, out_dim = prepare_params(w1, w2, b2, w3, b3)

    out = naive_mlp(x, params, out_dim)
    out = jax.block_until_ready(out)

    # Pure-JAX f32 reference check (bf16 matmuls + bf16 output store ->
    # loosened tolerance).
    h = jnp.maximum(x @ w1.T, 0.0)
    h = jnp.maximum(h @ w2.T + b2, 0.0)
    ref = jax.nn.sigmoid(h @ w3.T + b3)
    assert out.shape == (batch, 2)
    assert jnp.allclose(out, ref, atol=2e-2, rtol=2e-2), (
        f"max abs err = {jnp.max(jnp.abs(out - ref))}")

    print("KERNEL_OK")
</pallas_src>

<mosaic_0001>
module attributes {stable_mosaic.version = 11 : i64} {
  func.func @_mlp_kernel(%arg0: i32, %arg1: memref<8x16xf32, #tpu.memory_space<vmem>>, %arg2: memref<16x16xbf16, #tpu.memory_space<vmem>>, %arg3: memref<16x16xbf16, #tpu.memory_space<vmem>>, %arg4: memref<1x16xf32, #tpu.memory_space<vmem>>, %arg5: memref<16x128xbf16, #tpu.memory_space<vmem>>, %arg6: memref<1x128xf32, #tpu.memory_space<vmem>>, %arg7: memref<8x128xbf16, #tpu.memory_space<vmem>>) attributes {dimension_semantics = [#tpu.dimension_semantics<parallel>], iteration_bounds = array<i64: 1>, scalar_prefetch = 0 : i64, scratch_operands = 0 : i64, tpu.core_type = #tpu.core_type<tc>, window_params = [{transform_indices = @transform_0, window_bounds = array<i64: 8, 16>}, {pipeline_mode = #tpu.pipeline_mode<synchronous>, transform_indices = @transform_1, window_bounds = array<i64: 16, 16>}, {pipeline_mode = #tpu.pipeline_mode<synchronous>, transform_indices = @transform_2, window_bounds = array<i64: 16, 16>}, {pipeline_mode = #tpu.pipeline_mode<synchronous>, transform_indices = @transform_3, window_bounds = array<i64: 1, 16>}, {pipeline_mode = #tpu.pipeline_mode<synchronous>, transform_indices = @transform_4, window_bounds = array<i64: 16, 128>}, {pipeline_mode = #tpu.pipeline_mode<synchronous>, transform_indices = @transform_5, window_bounds = array<i64: 1, 128>}, {transform_indices = @transform_6, window_bounds = array<i64: 8, 128>}]} {
    %c0 = arith.constant 0 : index
    %c0_0 = arith.constant 0 : index
    %0 = vector.load %arg1[%c0, %c0_0] : memref<8x16xf32, #tpu.memory_space<vmem>>, vector<8x16xf32>
    %1 = arith.truncf %0 : vector<8x16xf32> to vector<8x16xbf16>
    %c0_1 = arith.constant 0 : index
    %c0_2 = arith.constant 0 : index
    %2 = vector.load %arg2[%c0_1, %c0_2] : memref<16x16xbf16, #tpu.memory_space<vmem>>, vector<16x16xbf16>
    %cst = arith.constant dense<0.000000e+00> : vector<8x16xf32>
    %3 = tpu.matmul %1, %2, %cst {dimension_numbers = #tpu.dot_dimension_numbers<[1], [0], [0], [1], [0, 0, 1, 1], [], []>} : vector<8x16xbf16>, vector<16x16xbf16>, vector<8x16xf32> -> vector<8x16xf32>
    %cst_3 = arith.constant 0.000000e+00 : f32
    %4 = vector.broadcast %cst_3 : f32 to vector<8x16xf32>
    %5 = arith.maximumf %3, %4 : vector<8x16xf32>
    %6 = arith.truncf %5 : vector<8x16xf32> to vector<8x16xbf16>
    %c0_4 = arith.constant 0 : index
    %c0_5 = arith.constant 0 : index
    %7 = vector.load %arg3[%c0_4, %c0_5] : memref<16x16xbf16, #tpu.memory_space<vmem>>, vector<16x16xbf16>
    %cst_6 = arith.constant dense<0.000000e+00> : vector<8x16xf32>
    %8 = tpu.matmul %6, %7, %cst_6 {dimension_numbers = #tpu.dot_dimension_numbers<[1], [0], [0], [1], [0, 0, 1, 1], [], []>} : vector<8x16xbf16>, vector<16x16xbf16>, vector<8x16xf32> -> vector<8x16xf32>
    %c0_7 = arith.constant 0 : index
    %c0_8 = arith.constant 0 : index
    %9 = vector.load %arg4[%c0_7, %c0_8] : memref<1x16xf32, #tpu.memory_space<vmem>>, vector<1x16xf32>
    %10 = vector.broadcast %9 : vector<1x16xf32> to vector<8x16xf32>
    %11 = arith.addf %8, %10 : vector<8x16xf32>
    %cst_9 = arith.constant 0.000000e+00 : f32
    %12 = vector.broadcast %cst_9 : f32 to vector<8x16xf32>
    %13 = arith.maximumf %11, %12 : vector<8x16xf32>
    %14 = arith.truncf %13 : vector<8x16xf32> to vector<8x16xbf16>
    %c0_10 = arith.constant 0 : index
    %c0_11 = arith.constant 0 : index
    %15 = vector.load %arg5[%c0_10, %c0_11] : memref<16x128xbf16, #tpu.memory_space<vmem>>, vector<16x128xbf16>
    %cst_12 = arith.constant dense<0.000000e+00> : vector<8x128xf32>
    %16 = tpu.matmul %14, %15, %cst_12 {dimension_numbers = #tpu.dot_dimension_numbers<[1], [0], [0], [1], [0, 0, 1, 1], [], []>} : vector<8x16xbf16>, vector<16x128xbf16>, vector<8x128xf32> -> vector<8x128xf32>
    %c0_13 = arith.constant 0 : index
    %c0_14 = arith.constant 0 : index
    %17 = vector.load %arg6[%c0_13, %c0_14] : memref<1x128xf32, #tpu.memory_space<vmem>>, vector<1x128xf32>
    %18 = vector.broadcast %17 : vector<1x128xf32> to vector<8x128xf32>
    %19 = arith.addf %16, %18 : vector<8x128xf32>
    %20 = arith.negf %19 : vector<8x128xf32>
    %21 = math.exp %20 : vector<8x128xf32>
    %cst_15 = arith.constant 1.000000e+00 : f32
    %22 = vector.broadcast %cst_15 : f32 to vector<8x128xf32>
    %23 = arith.addf %22, %21 : vector<8x128xf32>
    %24 = arith.divf %22, %23 : vector<8x128xf32>
    %25 = arith.truncf %24 : vector<8x128xf32> to vector<8x128xbf16>
    %c0_16 = arith.constant 0 : index
    %c0_17 = arith.constant 0 : index
    %26 = vector.load %arg7[%c0_16, %c0_17] : memref<8x128xbf16, #tpu.memory_space<vmem>>, vector<8x128xbf16>
    tpu.vector_store %arg7[%c0_16, %c0_17], %25 {strides = array<i32>} : memref<8x128xbf16, #tpu.memory_space<vmem>>, vector<8x128xbf16>,
    return
  }
  func.func @transform_0(%arg0: i32) -> (i32, i32) {
    %c0_i32 = arith.constant 0 : i32
    %c0_i32_0 = arith.constant 0 : i32
    return %arg0, %c0_i32 : i32, i32
  }
  func.func @transform_1(%arg0: i32) -> (i32, i32) {
    %c0_i32 = arith.constant 0 : i32
    %c0_i32_0 = arith.constant 0 : i32
    %c0_i32_1 = arith.constant 0 : i32
    return %c0_i32, %c0_i32_0 : i32, i32
  }
  func.func @transform_2(%arg0: i32) -> (i32, i32) {
    %c0_i32 = arith.constant 0 : i32
    %c0_i32_0 = arith.constant 0 : i32
    %c0_i32_1 = arith.constant 0 : i32
    return %c0_i32, %c0_i32_0 : i32, i32
  }
  func.func @transform_3(%arg0: i32) -> (i32, i32) {
    %c0_i32 = arith.constant 0 : i32
    %c0_i32_0 = arith.constant 0 : i32
    %c0_i32_1 = arith.constant 0 : i32
    return %c0_i32, %c0_i32_0 : i32, i32
  }
  func.func @transform_4(%arg0: i32) -> (i32, i32) {
    %c0_i32 = arith.constant 0 : i32
    %c0_i32_0 = arith.constant 0 : i32
    %c0_i32_1 = arith.constant 0 : i32
    return %c0_i32, %c0_i32_0 : i32, i32
  }
  func.func @transform_5(%arg0: i32) -> (i32, i32) {
    %c0_i32 = arith.constant 0 : i32
    %c0_i32_0 = arith.constant 0 : i32
    %c0_i32_1 = arith.constant 0 : i32
    return %c0_i32, %c0_i32_0 : i32, i32
  }
  func.func @transform_6(%arg0: i32) -> (i32, i32) {
    %c0_i32 = arith.constant 0 : i32
    %c0_i32_0 = arith.constant 0 : i32
    return %arg0, %c0_i32 : i32, i32
  }
}

</mosaic_0001>

<llo_original>
// kernel: tpu_custom_call.1
$region0: #{tpu_custom_call.1}
  #allocation0 [shape = 'u32[]', space=smem, size = 0x4, offset = 0x4, fixed_abs, tag = 'smem constant byte address 0x4 - core index']
  #allocation1 [shape = 'u32[144,128]{1,0:T(1,128)}', space=vmem, size = 0x12000, scoped, tag = 'internal scratch']
  %s0 = inlined_call_operand.hbm [shape: f32[8,16], index: 0, kind: input, shape index: {}]
  %s1 = inlined_call_operand.hbm [shape: bf16[16,16], index: 1, kind: input, shape index: {}]
  %s2 = inlined_call_operand.hbm [shape: bf16[16,16], index: 2, kind: input, shape index: {}]
  %s3 = inlined_call_operand.vmem [shape: f32[1,16], index: 3, kind: input, shape index: {}]
  %s4 = inlined_call_operand.vmem [shape: bf16[16,128], index: 4, kind: input, shape index: {}]
  %s5 = inlined_call_operand.vmem [shape: f32[1,128], index: 5, kind: input, shape index: {}]
  %s6 = inlined_call_operand.hbm [shape: bf16[8,128], index: 6, kind: output, shape index: {}]
  %s7 = sld [smem:[#allocation0]]
  $region46: #{tpu_custom_call.1} parent=0
    _
  %s9 = ssub.s32 1, %s7
  %s10 = scalar_select 0, %s9, %s7
  $region1: #{tpu_custom_call.1} parent=0
    #allocation2 [shape = 'u8[4096]{0}', space=vmem, size = 0x1000, scoped, tag = 'input window, operand 0, single buffered']
    #allocation3 [shape = 's32[1]{0}', space=sflag, size = 0x4, scoped, tag = 'scoped memory for tpu_custom_call.1']
    #allocation4 [shape = 's32[1]{0}', space=sflag, size = 0x4, scoped, tag = 'scoped memory for tpu_custom_call.1']
    #allocation5 [shape = 'u8[4096]{0}', space=vmem, size = 0x1000, scoped, tag = 'input window, operand 1, single buffered']
    #allocation6 [shape = 's32[1]{0}', space=sflag, size = 0x4, scoped, tag = 'scoped memory for tpu_custom_call.1']
    #allocation7 [shape = 'u8[4096]{0}', space=vmem, size = 0x1000, scoped, tag = 'input window, operand 2, single buffered']
    #allocation8 [shape = 'u8[2048]{0}', space=vmem, size = 0x800, scoped, tag = 'output window, operand 0, single buffered']
    %11 = vsyncpa [#allocation3], 0
    %12 = vsyncpa [#allocation6], 0
    %13 = vsyncpa [#allocation4], 0
    // Predicated region
    $region2: #{tpu_custom_call.1} parent=1 // pred_check
      _
    $region3: #{tpu_custom_call.1} parent=1 // pred_check_branch
      %15 = sbr.rel (0) target = $region5
    $region4: #{tpu_custom_call.1} parent=1 // pred_region
      %s17 = ssub.s32 128, 128
      %18 = vsyncadd [#allocation3], %s17
      %s20 = sshll.u32 [#allocation2], 4
      %s21 = int_to_ptr.vmem [resolvable:$true] %s20
      %23 = dma.hbm_to_vmem [thread:$0]  %s0, 128, %s21, [#allocation3]
    $region5: #{tpu_custom_call.1} parent=1 // pred_fallthru
      _
    // Predicated region
    $region6: #{tpu_custom_call.1} parent=1 // pred_check
      _
    $region7: #{tpu_custom_call.1} parent=1 // pred_check_branch
      %25 = sbr.rel (0) target = $region9
    $region8: #{tpu_custom_call.1} parent=1 // pred_region
      %s27 = ssub.s32 128, 128
      %28 = vsyncadd [#allocation6], %s27
      %s29 = sshll.u32 [#allocation5], 4
      %s30 = int_to_ptr.vmem [resolvable:$true] %s29
      %35 = dma.hbm_to_vmem [thread:$0]  %s1, 128, %s30, [#allocation6], 64, 64, 4
    $region9: #{tpu_custom_call.1} parent=1 // pred_fallthru
      _
    // Predicated region
    $region10: #{tpu_custom_call.1} parent=1 // pred_check
      _
    $region11: #{tpu_custom_call.1} parent=1 // pred_check_branch
      %37 = sbr.rel (0) target = $region13
    $region12: #{tpu_custom_call.1} parent=1 // pred_region
      %s39 = ssub.s32 128, 128
      %40 = vsyncadd [#allocation6], %s39
      %s41 = sshll.u32 [#allocation7], 4
      %s42 = int_to_ptr.vmem [resolvable:$true] %s41
      %47 = dma.hbm_to_vmem [thread:$0]  %s2, 128, %s42, [#allocation6], 64, 64, 4
    $region13: #{tpu_custom_call.1} parent=1 // pred_fallthru
      _
    // Predicated region
    $region14: #{tpu_custom_call.1} parent=1 // pred_check
      _
    $region15: #{tpu_custom_call.1} parent=1 // pred_check_branch
      %49 = sbr.rel (0) target = $region17
    $region16: #{tpu_custom_call.1} parent=1 // pred_region
      _
    $region17: #{tpu_custom_call.1} parent=1 // pred_fallthru
      _
    // Predicated region
    $region18: #{tpu_custom_call.1} parent=1 // pred_check
      _
    $region19: #{tpu_custom_call.1} parent=1 // pred_check_branch
      %51 = sbr.rel (0) target = $region21
    $region20: #{tpu_custom_call.1} parent=1 // pred_region
      _
    $region21: #{tpu_custom_call.1} parent=1 // pred_fallthru
      _
    // Predicated region
    $region22: #{tpu_custom_call.1} parent=1 // pred_check
      _
    $region23: #{tpu_custom_call.1} parent=1 // pred_check_branch
      %53 = sbr.rel (0) target = $region25
    $region24: #{tpu_custom_call.1} parent=1 // pred_region
      _
    $region25: #{tpu_custom_call.1} parent=1 // pred_fallthru
      _
    // Predicated region
    $region26: #{tpu_custom_call.1} parent=1 // pred_check
      _
    $region27: #{tpu_custom_call.1} parent=1 // pred_check_branch
      %55 = sbr.rel (0) target = $region29
    $region28: #{tpu_custom_call.1} parent=1 // pred_region
      %56 = dma.done [#allocation3], 128
    $region29: #{tpu_custom_call.1} parent=1 // pred_fallthru
      _
    // Predicated region
    $region30: #{tpu_custom_call.1} parent=1 // pred_check
      _
    $region31: #{tpu_custom_call.1} parent=1 // pred_check_branch
      %58 = sbr.rel (0) target = $region33
    $region32: #{tpu_custom_call.1} parent=1 // pred_region
      %59 = dma.done [#allocation6], 128
    $region33: #{tpu_custom_call.1} parent=1 // pred_fallthru
      _
    // Predicated region
    $region34: #{tpu_custom_call.1} parent=1 // pred_check
      _
    $region35: #{tpu_custom_call.1} parent=1 // pred_check_branch
      %61 = sbr.rel (0) target = $region37
    $region36: #{tpu_custom_call.1} parent=1 // pred_region
      %62 = dma.done [#allocation6], 128
    $region37: #{tpu_custom_call.1} parent=1 // pred_fallthru
      _
    %v64 = vld [vmem:[#allocation2] sm:$0xff]
    %v65 = vpack.c.bf16 %v64, %v64
    %v66 = vld [vmem:[#allocation5] sm:$0xf]
    %v67 = vld [vmem:[#allocation5 + $0x4] sm:$0xf]
    %v70 = vunpack.c.l.b16 %v66
    %v71 = vunpack.c.l.b16 %v67
    %v72 = vpack.c.b16 %v71, %v70
    %vm74 = vcmask 130048
    %v76 = vsel %vm74, %v65, 0
    %78 = vmatprep.subr.bf16.mxu0 0
    %79 = vmatpush1.bf16.msra.mxu0 %v72
    %80 = vmatprep.subr.bf16.mxu0 0
    %81 = vmatpush1.bf16.msra.mxu0 0
    %82 = vmatprep.subr.bf16.mxu0 0
    %83 = vmatpush1.bf16.msra.mxu0 0
    %84 = vmatprep.subr.bf16.mxu0 0
    %85 = vmatpush1.bf16.msra.mxu0 0
    %86 = vmatprep.subr.bf16.mxu0 0
    %87 = vmatpush1.bf16.msra.mxu0 0
    %88 = vmatprep.subr.bf16.mxu0 0
    %89 = vmatpush1.bf16.msra.mxu0 0
    %90 = vmatprep.subr.bf16.mxu0 0
    %91 = vmatpush1.bf16.msra.mxu0 0
    %92 = vmatprep.subr.bf16.mxu0 0
    %93 = vmatpush1.bf16.msra.mxu0 0
    %94 = vmatprep.subr.bf16.mxu0 0
    %95 = vmatpush1.bf16.msra.mxu0 0
    %96 = vmatprep.subr.bf16.mxu0 0
    %97 = vmatpush1.bf16.msra.mxu0 0
    %98 = vmatprep.subr.bf16.mxu0 0
    %99 = vmatpush1.bf16.msra.mxu0 0
    %100 = vmatprep.subr.bf16.mxu0 0
    %101 = vmatpush1.bf16.msra.mxu0 0
    %102 = vmatprep.subr.bf16.mxu0 0
    %103 = vmatpush1.bf16.msra.mxu0 0
    %104 = vmatprep.subr.bf16.mxu0 0
    %105 = vmatpush1.bf16.msra.mxu0 0
    %106 = vmatprep.subr.bf16.mxu0 0
    %107 = vmatpush1.bf16.msra.mxu0 0
    %108 = vmatprep.subr.bf16.mxu0 0
    %109 = vmatpush1.bf16.msra.mxu0 0
    %110 = vmatprep.mubr.bf16.mxu0 0
    %111 = vmatmul.mubr.bf16.gmra.mrb[0].mxu0 %v76
    %v112 = vpop.f32.mrb[0].mxu0
    %v113 = vadd.f32 0.0, %v112
    %v114 = vpop.f32.mrb[0].mxu0
    %v115 = vpop.f32.mrb[0].mxu0
    %v116 = vpop.f32.mrb[0].mxu0
    %117 = vdwg.mxu0
    %v118 = vmax.f32 %v113, 0.0
    %v119 = vpack.c.bf16 %v118, %v118
    %v120 = vld [vmem:[#allocation7] sm:$0xf]
    %v121 = vld [vmem:[#allocation7 + $0x4] sm:$0xf]
    %v122 = vld [vmem:[%s3] sm:$0x1]
    %v124 = vlaneseq
    %v125 = vshrl.u32 %v124, 7
    %v126 = vsub.s32 0, %v125
    %v127 = vrot.slane %v122, %v126
    %v131 = vunpack.c.l.b16 %v120
    %v132 = vunpack.c.l.b16 %v121
    %v133 = vpack.c.b16 %v132, %v131
    %v136 = vsel %vm74, %v119, 0
    %138 = vmatprep.subr.bf16.mxu0 0
    %139 = vmatpush1.bf16.msra.mxu0 %v133
    %140 = vmatprep.subr.bf16.mxu0 0
    %141 = vmatpush1.bf16.msra.mxu0 0
    %142 = vmatprep.subr.bf16.mxu0 0
    %143 = vmatpush1.bf16.msra.mxu0 0
    %144 = vmatprep.subr.bf16.mxu0 0
    %145 = vmatpush1.bf16.msra.mxu0 0
    %146 = vmatprep.subr.bf16.mxu0 0
    %147 = vmatpush1.bf16.msra.mxu0 0
    %148 = vmatprep.subr.bf16.mxu0 0
    %149 = vmatpush1.bf16.msra.mxu0 0
    %150 = vmatprep.subr.bf16.mxu0 0
    %151 = vmatpush1.bf16.msra.mxu0 0
    %152 = vmatprep.subr.bf16.mxu0 0
    %153 = vmatpush1.bf16.msra.mxu0 0
    %154 = vmatprep.subr.bf16.mxu0 0
    %155 = vmatpush1.bf16.msra.mxu0 0
    %156 = vmatprep.subr.bf16.mxu0 0
    %157 = vmatpush1.bf16.msra.mxu0 0
    %158 = vmatprep.subr.bf16.mxu0 0
    %159 = vmatpush1.bf16.msra.mxu0 0
    %160 = vmatprep.subr.bf16.mxu0 0
    %161 = vmatpush1.bf16.msra.mxu0 0
    %162 = vmatprep.subr.bf16.mxu0 0
    %163 = vmatpush1.bf16.msra.mxu0 0
    %164 = vmatprep.subr.bf16.mxu0 0
    %165 = vmatpush1.bf16.msra.mxu0 0
    %166 = vmatprep.subr.bf16.mxu0 0
    %167 = vmatpush1.bf16.msra.mxu0 0
    %168 = vmatprep.subr.bf16.mxu0 0
    %169 = vmatpush1.bf16.msra.mxu0 0
    %170 = vmatprep.mubr.bf16.mxu0 0
    %171 = vmatmul.mubr.bf16.gmra.mrb[0].mxu0 %v136
    %v172 = vpop.f32.mrb[0].mxu0
    %v173 = vadd.f32 %v127, %v172
    %v174 = vpop.f32.mrb[0].mxu0
    %v175 = vpop.f32.mrb[0].mxu0
    %v176 = vpop.f32.mrb[0].mxu0
    %177 = vdwg.mxu0
    %v178 = vmax.f32 %v173, 0.0
    %v179 = vpack.c.bf16 %v178, %v178
    %v180 = vld [vmem:[%s4] sm:$0xf]
    %v181 = vld [vmem:[%s4 + $0x4] sm:$0xf]
    %v182 = vld [vmem:[%s5] sm:$0x1]
    %v184 = vlaneseq
    %v185 = vshrl.u32 %v184, 7
    %v186 = vsub.s32 0, %v185
    %v187 = vrot.slane %v182, %v186
    %v191 = vunpack.c.l.b16 %v180
    %v192 = vunpack.c.l.b16 %v181
    %v193 = vpack.c.b16 %v192, %v191
    %v196 = vsel %vm74, %v179, 0
    %198 = vmatprep.subr.bf16.mxu0 0
    %199 = vmatpush1.bf16.msra.mxu0 %v193
    %200 = vmatprep.subr.bf16.mxu0 0
    %201 = vmatpush1.bf16.msra.mxu0 0
    %202 = vmatprep.subr.bf16.mxu0 0
    %203 = vmatpush1.bf16.msra.mxu0 0
    %204 = vmatprep.subr.bf16.mxu0 0
    %205 = vmatpush1.bf16.msra.mxu0 0
    %206 = vmatprep.subr.bf16.mxu0 0
    %207 = vmatpush1.bf16.msra.mxu0 0
    %208 = vmatprep.subr.bf16.mxu0 0
    %209 = vmatpush1.bf16.msra.mxu0 0
    %210 = vmatprep.subr.bf16.mxu0 0
    %211 = vmatpush1.bf16.msra.mxu0 0
    %212 = vmatprep.subr.bf16.mxu0 0
    %213 = vmatpush1.bf16.msra.mxu0 0
    %214 = vmatprep.subr.bf16.mxu0 0
    %215 = vmatpush1.bf16.msra.mxu0 0
    %216 = vmatprep.subr.bf16.mxu0 0
    %217 = vmatpush1.bf16.msra.mxu0 0
    %218 = vmatprep.subr.bf16.mxu0 0
    %219 = vmatpush1.bf16.msra.mxu0 0
    %220 = vmatprep.subr.bf16.mxu0 0
    %221 = vmatpush1.bf16.msra.mxu0 0
    %222 = vmatprep.subr.bf16.mxu0 0
    %223 = vmatpush1.bf16.msra.mxu0 0
    %224 = vmatprep.subr.bf16.mxu0 0
    %225 = vmatpush1.bf16.msra.mxu0 0
    %226 = vmatprep.subr.bf16.mxu0 0
    %227 = vmatpush1.bf16.msra.mxu0 0
    %228 = vmatprep.subr.bf16.mxu0 0
    %229 = vmatpush1.bf16.msra.mxu0 0
    %230 = vmatprep.mubr.bf16.mxu0 0
    %231 = vmatmul.mubr.bf16.gmra.mrb[0].mxu0 %v196
    %v232 = vpop.f32.mrb[0].mxu0
    %v233 = vadd.f32 %v187, %v232
    %v234 = vpop.f32.mrb[0].mxu0
    %v235 = vpop.f32.mrb[0].mxu0
    %v236 = vpop.f32.mrb[0].mxu0
    %237 = vdwg.mxu0
    %v238 = vxor.u32 %v233, 2147483648
    %v239 = vmul.f32 %v238, 1.442695
    %v240 = vpow.pop %v239
    %v241 = vadd.f32 %v240, 1.0
    %v242 = vrcp.pop %v241
    %v243 = vmul.f32 1.0, %v242
    %v244 = vpack.c.bf16 %v243, %v243
    %245 = vst [vmem:[#allocation8] sm:$0xf] %v244
    // Predicated region
    $region38: #{tpu_custom_call.1} parent=1 // pred_check
      _
    $region39: #{tpu_custom_call.1} parent=1 // pred_check_branch
      %247 = sbr.rel (0) target = $region41
    $region40: #{tpu_custom_call.1} parent=1 // pred_region
      %s249 = ssub.s32 64, 64
      %250 = vsyncadd [#allocation4], %s249
      %s252 = sshll.u32 [#allocation8], 4
      %s253 = int_to_ptr.vmem [resolvable:$true] %s252
      %255 = dma.vmem_to_hbm [thread:$0]  %s253, 64, %s6, [#allocation4]
    $region41: #{tpu_custom_call.1} parent=1 // pred_fallthru
      _
    // Predicated region
    $region42: #{tpu_custom_call.1} parent=1 // pred_check
      _
    $region43: #{tpu_custom_call.1} parent=1 // pred_check_branch
      %257 = sbr.rel (0) target = $region45
    $region44: #{tpu_custom_call.1} parent=1 // pred_region
      %258 = dma.done [#allocation4], 64
    $region45: #{tpu_custom_call.1} parent=1 // pred_fallthru
      _
    %259 = vsyncpa [#allocation3], 1
    %260 = vsyncpa [#allocation6], 1
    %261 = vsyncpa [#allocation4], 1

</llo_original>
